<compile_context>
chip_gen: v7x
topology: tpu7x:2x2x1
jax: 0.10.0
libtpu: 0.0.40
codegen_flags: <defaults>
</compile_context>

<pallas_src>
from functools import partial

import jax
import jax.numpy as jnp
from jax import lax
from jax.experimental import pallas as pl
from jax.experimental.pallas import tpu as pltpu


def _round_up(x, m):
    return (x + m - 1) // m * m


def _conv3x3_prelu_kernel(alpha_ref, x_ref, w_ref, o_ref):
    # alpha_ref : (1, 1) f32 in SMEM      -- PReLU slope (shared).
    # x_ref     : (tm, Kpad) bf16          -- im2row rows (batch*height), K-padded.
    # w_ref     : (Kpad, Mout) bf16        -- K-stacked width-Toeplitz 3x3 weight.
    # o_ref     : (tm, Mout) f32           -- lane-dense output tile.
    acc = jnp.dot(x_ref[...], w_ref[...], preferred_element_type=jnp.float32)
    alpha = alpha_ref[0, 0]
    o_ref[...] = jnp.where(acc > 0, acc, alpha * acc).astype(o_ref.dtype)


def _toeplitz_weight(weight_oihw, W, pad=1):
    """Expand (Cout, Cin, K, K) -> (K, Cin*(W+2*pad), W*Cout) width-Toeplitz."""
    Cout, Cin, K, _ = weight_oihw.shape
    Wp = W + 2 * pad
    wcol = jnp.arange(Wp)
    wout = jnp.arange(W)
    kw_idx = wcol[:, None] - wout[None, :]                 # (Wp, W)
    valid = (kw_idx >= 0) & (kw_idx < K)
    kw_c = jnp.clip(kw_idx, 0, K - 1)
    w_t = jnp.transpose(weight_oihw, (2, 3, 1, 0))         # (K, K, Cin, Cout)
    gath = w_t[:, kw_c] * valid[None, :, :, None, None]    # (K, Wp, W, Cin, Cout)
    wk = jnp.transpose(gath, (0, 3, 1, 2, 4))              # (K, Cin, Wp, W, Cout)
    return wk.reshape(K, Cin * Wp, W * Cout)


def prepare_conv_block1_weight(weight_oihw, W, pad=1, k_align=128):
    """One-time (per weight) packing: Toeplitz-expand, K-stack, K-pad, bf16."""
    Cout, Cin, K, K2 = weight_oihw.shape
    assert K == 3 and K2 == 3, "kernel specialized for 3x3"
    Wp = W + 2 * pad
    KC = Cin * Wp
    wk = _toeplitz_weight(weight_oihw, W, pad)             # (3, KC, W*Cout)
    wm = wk.reshape(K * KC, W * Cout)                      # (216, 128) at demo size
    Kpad = _round_up(K * KC, k_align)                      # 216 -> 256
    wm = jnp.pad(wm, ((0, Kpad - K * KC), (0, 0)))
    return wm.astype(jnp.bfloat16)


@partial(jax.jit, static_argnames=("cout",))
def conv_block1_forward(x_nchw, wm_packed, alpha, *, cout):
    """Conv2d(3x3, s=1, p=1, no bias) + PReLU.  wm_packed from prepare_conv_block1_weight."""
    N, Cin, H, W = x_nchw.shape
    pad = 1
    Hp, Wp = H + 2 * pad, W + 2 * pad
    KC = Cin * Wp
    K3 = 3 * KC
    Kpad, Mout = wm_packed.shape
    assert Mout == W * cout
    assert Kpad == _round_up(K3, 128)

    # --- im2row glue (tiny; ~3x input size, fused under jit; NO 9x im2col) ---
    xp = jnp.pad(x_nchw, ((0, 0), (0, 0), (pad, pad), (pad, pad)))     # (N,Cin,Hp,Wp)
    x2 = jnp.transpose(xp, (0, 2, 1, 3)).reshape(N, Hp, KC)            # rows=h, cols=(ci,wcol)
    # height-window expansion in the wrapper: row h = concat(padded rows h..h+2)
    x3 = jnp.concatenate([x2[:, kh:kh + H, :] for kh in range(3)], axis=-1)  # (N,H,3*KC)
    x3 = jnp.pad(x3, ((0, 0), (0, 0), (0, Kpad - K3)))                 # K-pad to lane multiple
    xm = x3.reshape(N * H, Kpad).astype(jnp.bfloat16)

    alpha = jnp.asarray(alpha, jnp.float32).reshape(1, 1)

    # --- M blocking: single step at small sizes; 256-row tiles for big batches ---
    M = N * H
    tm = M if M <= 256 else 256
    Mp = _round_up(M, tm)
    if Mp != M:
        xm = jnp.pad(xm, ((0, Mp - M), (0, 0)))
    grid_m = Mp // tm
    semantics = ("parallel",) if grid_m > 1 else ("arbitrary",)

    out = pl.pallas_call(
        _conv3x3_prelu_kernel,
        out_shape=jax.ShapeDtypeStruct((Mp, Mout), jnp.float32),
        grid_spec=pltpu.PrefetchScalarGridSpec(
            num_scalar_prefetch=0,
            grid=(grid_m,),
            in_specs=[
                pl.BlockSpec((1, 1), lambda i: (0, 0),
                             memory_space=pltpu.MemorySpace.SMEM),      # alpha
                pl.BlockSpec((tm, Kpad), lambda i: (i, 0)),             # im2row rows
                pl.BlockSpec((Kpad, Mout), lambda i: (0, 0)),           # resident weight
            ],
            out_specs=pl.BlockSpec((tm, Mout), lambda i: (i, 0)),
        ),
        compiler_params=pltpu.CompilerParams(dimension_semantics=semantics),
    )(alpha, xm, wm_packed)

    out = out[:M]
    # (N*H, W*Cout) -> (N, Cout, H, W); tiny output permute.
    return jnp.transpose(out.reshape(N, H, W, cout), (0, 3, 1, 2))


def conv_block1_pallas(x_nchw, weight_oihw, prelu_alpha):
    """Convenience wrapper: pack weight + run forward (pack once in production)."""
    N, Cin, H, W = x_nchw.shape
    Cout = weight_oihw.shape[0]
    wm = prepare_conv_block1_weight(weight_oihw, W)
    return conv_block1_forward(x_nchw, wm, prelu_alpha, cout=Cout)


def _reference(x_nchw, weight_oihw, prelu_alpha):
    y = lax.conv_general_dilated(
        x_nchw, weight_oihw, window_strides=(1, 1), padding="SAME",
        dimension_numbers=("NCHW", "OIHW", "NCHW"),
        precision=lax.Precision.HIGHEST)
    return jnp.where(y > 0, y, prelu_alpha * y)


if __name__ == "__main__":
    key = jax.random.PRNGKey(0)
    kx, kw = jax.random.split(key)

    N, Cin, Cout, H, W = 2, 4, 8, 16, 16

    x = jax.random.normal(kx, (N, Cin, H, W), dtype=jnp.float32)
    # Deterministic parameter init (Conv2d weight, bias=False; PReLU default 0.25).
    weight = jax.random.normal(kw, (Cout, Cin, 3, 3), dtype=jnp.float32) * 0.1
    prelu_alpha = 0.25

    out = conv_block1_pallas(x, weight, prelu_alpha)
    out = jax.block_until_ready(out)

    # Kernel feeds the MXU bf16 operands (f32 accumulation), so compare against
    # a reference evaluated on the same bf16-rounded operands.
    xb = x.astype(jnp.bfloat16).astype(jnp.float32)
    wb = weight.astype(jnp.bfloat16).astype(jnp.float32)
    ref = _reference(xb, wb, prelu_alpha)

    assert out.shape == (N, Cout, H, W)
    assert jnp.allclose(out, ref, atol=1e-2, rtol=1e-2), "mismatch vs reference"

    print("KERNEL_OK")
</pallas_src>

<mosaic_0001>
module attributes {stable_mosaic.version = 11 : i64} {
  func.func @_conv3x3_prelu_kernel(%arg0: i32, %arg1: memref<1x1xf32, #tpu.memory_space<smem>>, %arg2: memref<32x256xbf16, #tpu.memory_space<vmem>>, %arg3: memref<256x128xbf16, #tpu.memory_space<vmem>>, %arg4: memref<32x128xf32, #tpu.memory_space<vmem>>) attributes {dimension_semantics = [#tpu.dimension_semantics<arbitrary>], iteration_bounds = array<i64: 1>, scalar_prefetch = 0 : i64, scratch_operands = 0 : i64, tpu.core_type = #tpu.core_type<tc>, window_params = [{transform_indices = @transform_0, window_bounds = array<i64: 1, 1>}, {transform_indices = @transform_1, window_bounds = array<i64: 32, 256>}, {pipeline_mode = #tpu.pipeline_mode<synchronous>, transform_indices = @transform_2, window_bounds = array<i64: 256, 128>}, {transform_indices = @transform_3, window_bounds = array<i64: 32, 128>}]} {
    %c0 = arith.constant 0 : index
    %c0_0 = arith.constant 0 : index
    %0 = vector.load %arg2[%c0, %c0_0] : memref<32x256xbf16, #tpu.memory_space<vmem>>, vector<32x256xbf16>
    %c0_1 = arith.constant 0 : index
    %c0_2 = arith.constant 0 : index
    %1 = vector.load %arg3[%c0_1, %c0_2] : memref<256x128xbf16, #tpu.memory_space<vmem>>, vector<256x128xbf16>
    %cst = arith.constant dense<0.000000e+00> : vector<32x128xf32>
    %2 = tpu.matmul %0, %1, %cst {dimension_numbers = #tpu.dot_dimension_numbers<[1], [0], [0], [1], [0, 0, 1, 1], [], []>} : vector<32x256xbf16>, vector<256x128xbf16>, vector<32x128xf32> -> vector<32x128xf32>
    %c0_3 = arith.constant 0 : index
    %c0_4 = arith.constant 0 : index
    %3 = memref.load %arg1[%c0_3, %c0_4] : memref<1x1xf32, #tpu.memory_space<smem>>
    %cst_5 = arith.constant 0.000000e+00 : f32
    %4 = vector.broadcast %cst_5 : f32 to vector<32x128xf32>
    %5 = arith.cmpf ogt, %2, %4 : vector<32x128xf32>
    %6 = vector.broadcast %3 : f32 to vector<32x128xf32>
    %7 = arith.mulf %6, %2 : vector<32x128xf32>
    %8 = arith.select %5, %2, %7 : vector<32x128xi1>, vector<32x128xf32>
    %c0_6 = arith.constant 0 : index
    %c0_7 = arith.constant 0 : index
    %9 = vector.load %arg4[%c0_6, %c0_7] : memref<32x128xf32, #tpu.memory_space<vmem>>, vector<32x128xf32>
    tpu.vector_store %arg4[%c0_6, %c0_7], %8 {strides = array<i32>} : memref<32x128xf32, #tpu.memory_space<vmem>>, vector<32x128xf32>,
    return
  }
  func.func @transform_0(%arg0: i32) -> (i32, i32) {
    %c0_i32 = arith.constant 0 : i32
    %c0_i32_0 = arith.constant 0 : i32
    %c0_i32_1 = arith.constant 0 : i32
    return %c0_i32, %c0_i32_0 : i32, i32
  }
  func.func @transform_1(%arg0: i32) -> (i32, i32) {
    %c0_i32 = arith.constant 0 : i32
    %c0_i32_0 = arith.constant 0 : i32
    return %arg0, %c0_i32 : i32, i32
  }
  func.func @transform_2(%arg0: i32) -> (i32, i32) {
    %c0_i32 = arith.constant 0 : i32
    %c0_i32_0 = arith.constant 0 : i32
    %c0_i32_1 = arith.constant 0 : i32
    return %c0_i32, %c0_i32_0 : i32, i32
  }
  func.func @transform_3(%arg0: i32) -> (i32, i32) {
    %c0_i32 = arith.constant 0 : i32
    %c0_i32_0 = arith.constant 0 : i32
    return %arg0, %c0_i32 : i32, i32
  }
}

</mosaic_0001>

<llo_original>
// kernel: conv_block1_forward.1
$region0: #{conv_block1_forward.1}
  #allocation0 [shape = 'u32[]', space=smem, size = 0x4, offset = 0x4, fixed_abs, tag = 'smem constant byte address 0x4 - core index']
  #allocation1 [shape = 'u32[144,128]{1,0:T(1,128)}', space=vmem, size = 0x12000, scoped, tag = 'internal scratch']
  #allocation2 [shape = 'f32[1,1]{1,0:T(1,128)S(6)}', space=smem, size = 0x200, scoped, tag = 'scoped memory for conv_block1_forward.1']
  %s0 = inlined_call_operand.<no memory space> [shape: f32[1,1], index: 0, kind: input, shape index: {}]
  %s1 = inlined_call_operand.vmem [shape: bf16[32,256], index: 1, kind: input, shape index: {}]
  %s2 = inlined_call_operand.vmem [shape: bf16[256,128], index: 2, kind: input, shape index: {}]
  %s3 = inlined_call_operand.vmem [shape: f32[32,128], index: 3, kind: output, shape index: {}]
  %s4 = sld [smem:[#allocation0]]
  $region22: #{conv_block1_forward.1} parent=0
    _
  %s6 = ssub.s32 1, %s4
  %s7 = scalar_select 0, %s6, %s4
  %8 = sst [smem:[#allocation2]] %s0
  // Predicated region
  $region2: #{conv_block1_forward.1} parent=0 // pred_check
    _
  $region3: #{conv_block1_forward.1} parent=0 // pred_check_branch
    %10 = sbr.rel (0) target = $region5
  $region4: #{conv_block1_forward.1} parent=0 // pred_region
    _
  $region5: #{conv_block1_forward.1} parent=0 // pred_fallthru
    _
  // Predicated region
  $region6: #{conv_block1_forward.1} parent=0 // pred_check
    _
  $region7: #{conv_block1_forward.1} parent=0 // pred_check_branch
    %12 = sbr.rel (0) target = $region9
  $region8: #{conv_block1_forward.1} parent=0 // pred_region
    _
  $region9: #{conv_block1_forward.1} parent=0 // pred_fallthru
    _
  // Predicated region
  $region10: #{conv_block1_forward.1} parent=0 // pred_check
    _
  $region11: #{conv_block1_forward.1} parent=0 // pred_check_branch
    %14 = sbr.rel (0) target = $region13
  $region12: #{conv_block1_forward.1} parent=0 // pred_region
    _
  $region13: #{conv_block1_forward.1} parent=0 // pred_fallthru
    _
  %v16 = vld [vmem:[%s1] sm:$0xff]
  %v17 = vld [vmem:[%s1 + $0x8] sm:$0xff]
  %v18 = vld [vmem:[%s1 + $0x10] sm:$0xff]
  %v19 = vld [vmem:[%s1 + $0x18] sm:$0xff]
  %v20 = vld [vmem:[%s2] sm:$0xf]
  %v21 = vld [vmem:[%s2 + $0x4] sm:$0xf]
  %v22 = vld [vmem:[%s2 + $0x8] sm:$0xf]
  %v23 = vld [vmem:[%s2 + $0xc] sm:$0xf]
  %v24 = vld [vmem:[%s2 + $0x10] sm:$0xf]
  %v25 = vld [vmem:[%s2 + $0x14] sm:$0xf]
  %v26 = vld [vmem:[%s2 + $0x18] sm:$0xf]
  %v27 = vld [vmem:[%s2 + $0x1c] sm:$0xf]
  %v28 = vld [vmem:[%s2 + $0x20] sm:$0xf]
  %v29 = vld [vmem:[%s2 + $0x24] sm:$0xf]
  %v30 = vld [vmem:[%s2 + $0x28] sm:$0xf]
  %v31 = vld [vmem:[%s2 + $0x2c] sm:$0xf]
  %v32 = vld [vmem:[%s2 + $0x30] sm:$0xf]
  %v33 = vld [vmem:[%s2 + $0x34] sm:$0xf]
  %v34 = vld [vmem:[%s2 + $0x38] sm:$0xf]
  %v35 = vld [vmem:[%s2 + $0x3c] sm:$0xf]
  %v36 = vld [vmem:[%s2 + $0x40] sm:$0xf]
  %v37 = vld [vmem:[%s2 + $0x44] sm:$0xf]
  %v38 = vld [vmem:[%s2 + $0x48] sm:$0xf]
  %v39 = vld [vmem:[%s2 + $0x4c] sm:$0xf]
  %v40 = vld [vmem:[%s2 + $0x50] sm:$0xf]
  %v41 = vld [vmem:[%s2 + $0x54] sm:$0xf]
  %v42 = vld [vmem:[%s2 + $0x58] sm:$0xf]
  %v43 = vld [vmem:[%s2 + $0x5c] sm:$0xf]
  %v44 = vld [vmem:[%s2 + $0x60] sm:$0xf]
  %v45 = vld [vmem:[%s2 + $0x64] sm:$0xf]
  %v46 = vld [vmem:[%s2 + $0x68] sm:$0xf]
  %v47 = vld [vmem:[%s2 + $0x6c] sm:$0xf]
  %v48 = vld [vmem:[%s2 + $0x70] sm:$0xf]
  %v49 = vld [vmem:[%s2 + $0x74] sm:$0xf]
  %v50 = vld [vmem:[%s2 + $0x78] sm:$0xf]
  %v51 = vld [vmem:[%s2 + $0x7c] sm:$0xf]
  %v56 = vunpack.c.l.b16 %v16
  %v57 = vunpack.c.h.b16 %v16
  %v58 = vunpack.c.l.b16 %v17
  %v59 = vunpack.c.h.b16 %v17
  %v60 = vunpack.c.l.b16 %v18
  %v61 = vunpack.c.h.b16 %v18
  %v62 = vunpack.c.l.b16 %v19
  %v63 = vunpack.c.h.b16 %v19
  %v64 = vpack.c.b16 %v58, %v56
  %v65 = vpack.c.b16 %v59, %v57
  %v66 = vpack.c.b16 %v62, %v60
  %v67 = vpack.c.b16 %v63, %v61
  %v104 = vunpack.c.l.b16 %v20
  %v105 = vunpack.c.l.b16 %v21
  %v106 = vunpack.c.l.b16 %v22
  %v107 = vunpack.c.l.b16 %v23
  %v108 = vunpack.c.l.b16 %v24
  %v109 = vunpack.c.l.b16 %v25
  %v110 = vunpack.c.l.b16 %v26
  %v111 = vunpack.c.l.b16 %v27
  %v112 = vunpack.c.l.b16 %v28
  %v113 = vunpack.c.l.b16 %v29
  %v114 = vunpack.c.l.b16 %v30
  %v115 = vunpack.c.l.b16 %v31
  %v116 = vunpack.c.l.b16 %v32
  %v117 = vunpack.c.l.b16 %v33
  %v118 = vunpack.c.l.b16 %v34
  %v119 = vunpack.c.l.b16 %v35
  %v120 = vunpack.c.l.b16 %v36
  %v121 = vunpack.c.l.b16 %v37
  %v122 = vunpack.c.l.b16 %v38
  %v123 = vunpack.c.l.b16 %v39
  %v124 = vunpack.c.l.b16 %v40
  %v125 = vunpack.c.l.b16 %v41
  %v126 = vunpack.c.l.b16 %v42
  %v127 = vunpack.c.l.b16 %v43
  %v128 = vunpack.c.l.b16 %v44
  %v129 = vunpack.c.l.b16 %v45
  %v130 = vunpack.c.l.b16 %v46
  %v131 = vunpack.c.l.b16 %v47
  %v132 = vunpack.c.l.b16 %v48
  %v133 = vunpack.c.l.b16 %v49
  %v134 = vunpack.c.l.b16 %v50
  %v135 = vunpack.c.l.b16 %v51
  %v136 = vpack.c.b16 %v105, %v104
  %v137 = vpack.c.b16 %v107, %v106
  %v138 = vpack.c.b16 %v109, %v108
  %v139 = vpack.c.b16 %v111, %v110
  %v140 = vpack.c.b16 %v113, %v112
  %v141 = vpack.c.b16 %v115, %v114
  %v142 = vpack.c.b16 %v117, %v116
  %v143 = vpack.c.b16 %v119, %v118
  %v144 = vpack.c.b16 %v121, %v120
  %v145 = vpack.c.b16 %v123, %v122
  %v146 = vpack.c.b16 %v125, %v124
  %v147 = vpack.c.b16 %v127, %v126
  %v148 = vpack.c.b16 %v129, %v128
  %v149 = vpack.c.b16 %v131, %v130
  %v150 = vpack.c.b16 %v133, %v132
  %v151 = vpack.c.b16 %v135, %v134
  %168 = vmatprep.subr.bf16.mxu0 0
  %169 = vmatpush1.bf16.msra.mxu0 %v136
  %170 = vmatprep.subr.bf16.mxu0 0
  %171 = vmatpush1.bf16.msra.mxu0 %v137
  %172 = vmatprep.subr.bf16.mxu0 0
  %173 = vmatpush1.bf16.msra.mxu0 %v138
  %174 = vmatprep.subr.bf16.mxu0 0
  %175 = vmatpush1.bf16.msra.mxu0 %v139
  %176 = vmatprep.subr.bf16.mxu0 0
  %177 = vmatpush1.bf16.msra.mxu0 %v140
  %178 = vmatprep.subr.bf16.mxu0 0
  %179 = vmatpush1.bf16.msra.mxu0 %v141
  %180 = vmatprep.subr.bf16.mxu0 0
  %181 = vmatpush1.bf16.msra.mxu0 %v142
  %182 = vmatprep.subr.bf16.mxu0 0
  %183 = vmatpush1.bf16.msra.mxu0 %v143
  %184 = vmatprep.subr.bf16.mxu0 0
  %185 = vmatpush1.bf16.msra.mxu0 %v144
  %186 = vmatprep.subr.bf16.mxu0 0
  %187 = vmatpush1.bf16.msra.mxu0 %v145
  %188 = vmatprep.subr.bf16.mxu0 0
  %189 = vmatpush1.bf16.msra.mxu0 %v146
  %190 = vmatprep.subr.bf16.mxu0 0
  %191 = vmatpush1.bf16.msra.mxu0 %v147
  %192 = vmatprep.subr.bf16.mxu0 0
  %193 = vmatpush1.bf16.msra.mxu0 %v148
  %194 = vmatprep.subr.bf16.mxu0 0
  %195 = vmatpush1.bf16.msra.mxu0 %v149
  %196 = vmatprep.subr.bf16.mxu0 0
  %197 = vmatpush1.bf16.msra.mxu0 %v150
  %198 = vmatprep.subr.bf16.mxu0 0
  %199 = vmatpush1.bf16.msra.mxu0 %v151
  %200 = vmatprep.mubr.bf16.mxu0 %v65
  %201 = vmatmul.mubr.bf16.gmra.mrb[0].mxu0 %v64
  %v202 = vpop.f32.mrb[0].mxu0
  %v203 = vadd.f32 0.0, %v202
  %v204 = vpop.f32.mrb[0].mxu0
  %v205 = vpop.f32.mrb[0].mxu0
  %v206 = vadd.f32 0.0, %v205
  %v207 = vpop.f32.mrb[0].mxu0
  %208 = vmatprep.mubr.bf16.mxu0 %v67
  %209 = vmatmul.mubr.bf16.gmra.mrb[0].mxu0 %v66
  %v210 = vpop.f32.mrb[0].mxu0
  %v211 = vadd.f32 0.0, %v210
  %v212 = vpop.f32.mrb[0].mxu0
  %v213 = vpop.f32.mrb[0].mxu0
  %v214 = vadd.f32 0.0, %v213
  %v215 = vpop.f32.mrb[0].mxu0
  %216 = vdwg.mxu0
  %s217 = sld [smem:[#allocation2]]
  %vm218 = vcmp.gt.f32.partialorder %v203, 0.0
  %vm219 = vcmp.gt.f32.partialorder %v206, 0.0
  %vm220 = vcmp.gt.f32.partialorder %v211, 0.0
  %vm221 = vcmp.gt.f32.partialorder %v214, 0.0
  %v222 = vstv %s217
  %v223 = vmul.f32 %v222, %v203
  %v224 = vmul.f32 %v222, %v206
  %v225 = vmul.f32 %v222, %v211
  %v226 = vmul.f32 %v222, %v214
  %v227 = vsel %vm218, %v203, %v223
  %v228 = vsel %vm219, %v206, %v224
  %v229 = vsel %vm220, %v211, %v225
  %v230 = vsel %vm221, %v214, %v226
  %231 = vst [vmem:[%s3] sm:$0xff] %v227
  %232 = vst [vmem:[%s3 + $0x8] sm:$0xff] %v228
  %233 = vst [vmem:[%s3 + $0x10] sm:$0xff] %v229
  %234 = vst [vmem:[%s3 + $0x18] sm:$0xff] %v230
  // Predicated region
  $region14: #{conv_block1_forward.1} parent=0 // pred_check
    _
  $region15: #{conv_block1_forward.1} parent=0 // pred_check_branch
    %236 = sbr.rel (0) target = $region17
  $region16: #{conv_block1_forward.1} parent=0 // pred_region
    _
  $region17: #{conv_block1_forward.1} parent=0 // pred_fallthru
    _
  // Predicated region
  $region18: #{conv_block1_forward.1} parent=0 // pred_check
    _
  $region19: #{conv_block1_forward.1} parent=0 // pred_check_branch
    %238 = sbr.rel (0) target = $region21
  $region20: #{conv_block1_forward.1} parent=0 // pred_region
    _
  $region21: #{conv_block1_forward.1} parent=0 // pred_fallthru
    _

</llo_original>
